<compile_context>
chip_gen: v5e
topology: v5e:2x2
jax: 0.10.0
libtpu: 0.0.40
codegen_flags: <defaults>
</compile_context>

<pallas_src>
import functools

import jax
import jax.numpy as jnp
import numpy as np
from jax import lax
from jax.experimental import pallas as pl
from jax.experimental.pallas import tpu as pltpu


# Conservative, chip-portable constants (v5e/v6e: 128 MiB VMEM, v7x: 64 MiB).
_TARGET_BLOCK_BYTES = 2 * 1024 * 1024   # ~2 MiB per input block
_VMEM_LIMIT_BYTES = 32 * 1024 * 1024    # requested scoped VMEM (safe on all chips)
_VMEM_BUDGET_BYTES = 24 * 1024 * 1024   # sizing budget, leaves headroom below limit


def _round_up(x, m):
    return (x + m - 1) // m * m


def patchify(images, patches_tuple, patch_size):
    """images (N, C, H, W) -> (N, L, sh*sw*C), matching torch's permute(0,2,4,3,5,1)."""
    b, c, h, w = images.shape
    ph, pw = patches_tuple
    sh, sw = patch_size
    x = images.reshape(b, c, ph, sh, pw, sw)
    x = jnp.transpose(x, (0, 2, 4, 3, 5, 1))          # (b, ph, pw, sh, sw, c)
    return x.reshape(b, ph * pw, sh * sw * c)


# --------------------------------------------------------------------------
# Kernels: each grid step emits (numerator, denominator) partials in one
# (1, 1, 2) block; the final tiny sum and the single /D happen in plain JAX.
# --------------------------------------------------------------------------
def _mae_partial_kernel(pred_ref, tgt_ref, mask_ref, out_ref):
    # pred_ref / tgt_ref: (bn, L, D); mask_ref: (bn, 1, L); out_ref: (1, 1, 2).
    diff = pred_ref[...].astype(jnp.float32) - tgt_ref[...].astype(jnp.float32)
    per_patch = jnp.sum(diff * diff, axis=-1)                 # (bn, L)
    m = mask_ref[...].astype(jnp.float32)[:, 0, :]            # (bn, L), lane-dense
    # Rows past N (non-divisible grid tail) carry unspecified pred/target data;
    # their padded mask is 0 and the where() keeps any NaN/Inf garbage out.
    per_patch = jnp.where(m > 0.0, per_patch, 0.0)
    out_ref[:, :, 0:1] = jnp.sum(per_patch * m).reshape(1, 1, 1)
    out_ref[:, :, 1:2] = jnp.sum(m).reshape(1, 1, 1)


def _mae_partial_slab_kernel(pred_ref, tgt_ref, mask_ref, out_ref, *, l, d):
    # Lane-dense path for D % 128 != 0.
    # pred_ref / tgt_ref: (bn, L*D) slabs; mask_ref: (bn, 1, L); out_ref: (1, 1, 2).
    diff = pred_ref[...].astype(jnp.float32) - tgt_ref[...].astype(jnp.float32)
    sq = diff * diff                                          # (bn, L*D)
    # Per-patch sums without reshaping the lane dim: contract on the MXU
    # against a (L*D, L) 0/1 indicator (element i belongs to patch i // D).
    # Built with iota + compares (no integer division) - cheap vs. the DMA.
    elem = lax.broadcasted_iota(jnp.int32, (l * d, l), 0)
    patch_start = lax.broadcasted_iota(jnp.int32, (l * d, l), 1) * d
    sel = jnp.logical_and(elem >= patch_start, elem < patch_start + d)
    sel = sel.astype(jnp.float32)
    per_patch = jnp.dot(sq, sel, preferred_element_type=jnp.float32)   # (bn, L)
    m = mask_ref[...].astype(jnp.float32)[:, 0, :]            # (bn, L)
    per_patch = jnp.where(m > 0.0, per_patch, 0.0)
    out_ref[:, :, 0:1] = jnp.sum(per_patch * m).reshape(1, 1, 1)
    out_ref[:, :, 1:2] = jnp.sum(m).reshape(1, 1, 1)


# --------------------------------------------------------------------------
# Block-batch sizing: ~2 MiB per input block, grid kept >= ~8 steps when N
# allows, double-buffered inputs + mask + f32 temporaries counted in VMEM.
# --------------------------------------------------------------------------
def _pick_bn_3d(n, l, d, pred_isz, tgt_isz):
    lp, dp = _round_up(l, 8), _round_up(d, 128)
    per_img_in = lp * dp * (pred_isz + tgt_isz)               # both inputs / image
    per_img_tmp = 2 * lp * dp * 4                             # diff + sq in f32
    per_img_mask = 8 * _round_up(l, 128) * 4
    bn = max(1, _TARGET_BLOCK_BYTES // (lp * dp * max(pred_isz, tgt_isz)))
    if n >= 8:                                                # >= ~8 grid steps
        bn = min(bn, max(1, n // 8))
    bn = max(1, min(bn, n))
    while bn > 1 and bn * (2 * (per_img_in + per_img_mask) + per_img_tmp) > _VMEM_BUDGET_BYTES:
        bn -= 1
    return bn


def _pick_bn_slab(n, l, d, pred_isz, tgt_isz):
    if n < 8:
        return n                       # bn == N keeps the 2-D sublane tiling rule happy
    row = _round_up(l * d, 128)
    per_img_in = row * (pred_isz + tgt_isz)
    per_img_tmp = 2 * row * 4
    per_img_mask = 8 * _round_up(l, 128) * 4
    sel_bytes = _round_up(l * d, 8) * _round_up(l, 128) * 4   # indicator matrix
    budget = max(_VMEM_BUDGET_BYTES - sel_bytes, 4 * 1024 * 1024)
    bn = max(8, (_TARGET_BLOCK_BYTES // (row * max(pred_isz, tgt_isz))) // 8 * 8)
    cap = max(8, ((n // 8) // 8) * 8)                         # >= ~8 grid steps
    bn = min(bn, cap)
    while bn > 8 and bn * (2 * (per_img_in + per_img_mask) + per_img_tmp) > budget:
        bn -= 8
    return bn


def mae_loss(pred, images, mask, patches_tuple=(14, 14), patch_size=(16, 16)):
    """Pallas implementation of MAELoss.forward(pred, images, mask, test=False)."""
    targets = patchify(images, patches_tuple, patch_size)     # (N, L, D), native dtype
    n, l, d = targets.shape
    assert pred.shape == (n, l, d), (pred.shape, (n, l, d))
    mask_f = mask.astype(jnp.float32).reshape(n, 1, l)        # lane dim = L (dense)

    pred_isz = jnp.dtype(pred.dtype).itemsize
    tgt_isz = jnp.dtype(targets.dtype).itemsize
    use_slab = (d % 128 != 0) and (l * d) % 128 == 0 and (l * d) <= 8192

    if use_slab:
        bn = _pick_bn_slab(n, l, d, pred_isz, tgt_isz)
        kernel = functools.partial(_mae_partial_slab_kernel, l=l, d=d)
        pred_in = pred.reshape(n, l * d)                      # free reshape (contiguous)
        tgt_in = targets.reshape(n, l * d)
        in_specs = [
            pl.BlockSpec((bn, l * d), lambda g: (g, 0)),      # pred slab
            pl.BlockSpec((bn, l * d), lambda g: (g, 0)),      # targets slab
            pl.BlockSpec((bn, 1, l), lambda g: (g, 0, 0)),    # mask
        ]
        extra_flops = 2 * n * l * d * l                       # indicator matmul
    else:
        bn = _pick_bn_3d(n, l, d, pred_isz, tgt_isz)
        kernel = _mae_partial_kernel
        pred_in, tgt_in = pred, targets
        in_specs = [
            pl.BlockSpec((bn, l, d), lambda g: (g, 0, 0)),    # pred
            pl.BlockSpec((bn, l, d), lambda g: (g, 0, 0)),    # targets
            pl.BlockSpec((bn, 1, l), lambda g: (g, 0, 0)),    # mask
        ]
        extra_flops = 0

    num_blocks = pl.cdiv(n, bn)
    # Pad only the (tiny) mask with zero rows so its reads are always in bounds;
    # the pred/target tail of the last block may read unspecified values, which
    # the kernel's mask-gated where() discards (numerically exact).
    if num_blocks * bn != n:
        mask_f = jnp.pad(mask_f, ((0, num_blocks * bn - n), (0, 0), (0, 0)))

    cost = pl.CostEstimate(
        flops=3 * n * l * d + extra_flops,
        transcendentals=0,
        bytes_accessed=(pred_in.size * pred_isz + tgt_in.size * tgt_isz
                        + mask_f.size * 4 + num_blocks * 2 * 4),
    )

    partials = pl.pallas_call(
        kernel,
        out_shape=jax.ShapeDtypeStruct((num_blocks, 1, 2), jnp.float32),
        grid_spec=pltpu.PrefetchScalarGridSpec(
            num_scalar_prefetch=0,
            grid=(num_blocks,),
            in_specs=in_specs,
            out_specs=pl.BlockSpec((1, 1, 2), lambda g: (g, 0, 0)),
        ),
        compiler_params=pltpu.CompilerParams(
            dimension_semantics=("parallel",),
            vmem_limit_bytes=_VMEM_LIMIT_BYTES),
        cost_estimate=cost,
    )(pred_in, tgt_in, mask_f)

    num = jnp.sum(partials[:, 0, 0])
    den = jnp.sum(partials[:, 0, 1])
    # The per-patch mean's /D is folded out of the kernel loop.
    return num / (jnp.float32(d) * den)


# --------------------------------------------------------------------------
# Pure-JAX reference and self-test.
# --------------------------------------------------------------------------
def _mae_loss_ref(pred, images, mask, patches_tuple, patch_size):
    targets = patchify(images, patches_tuple, patch_size)
    loss = jnp.mean(
        (pred.astype(jnp.float32) - targets.astype(jnp.float32)) ** 2, axis=-1)
    m = mask.astype(jnp.float32)
    return jnp.sum(loss * m) / jnp.sum(m)


def _run_case(key, n, c, patches_tuple, patch_size, dtype, tol):
    ph, pw = patches_tuple
    sh, sw = patch_size
    h, w = ph * sh, pw * sw
    l, d = ph * pw, sh * sw * c
    k_img, k_pred, k_mask = jax.random.split(key, 3)
    images = jax.random.normal(k_img, (n, c, h, w), dtype=jnp.float32).astype(dtype)
    pred = jax.random.normal(k_pred, (n, l, d), dtype=jnp.float32).astype(dtype)
    mask = jax.random.bernoulli(k_mask, p=0.75, shape=(n, l)).astype(jnp.float32)
    mask = mask.at[0, 0].set(1.0)                              # guarantee sum(mask) > 0
    out = jax.block_until_ready(
        mae_loss(pred, images, mask, patches_tuple, patch_size))
    ref = _mae_loss_ref(pred, images, mask, patches_tuple, patch_size)
    assert np.allclose(np.asarray(out), np.asarray(ref), rtol=tol, atol=tol), (
        dtype, n, c, float(out), float(ref))


if __name__ == "__main__":
    key = jax.random.PRNGKey(0)
    k0, k1, k2 = jax.random.split(key, 3)
    # 1) Toy config of the module at small scale: D = 4*4*3 = 48 (not a multiple
    #    of 128) -> lane-dense slab path; N=11 exercises the non-divisible tail.
    _run_case(k0, n=11, c=3, patches_tuple=(4, 4), patch_size=(4, 4),
              dtype=jnp.float32, tol=1e-5)
    # 2) 128-aligned D -> (bn, L, D) path; N=19 exercises mask zero-padding and
    #    the masked out-of-bounds tail block.
    _run_case(k1, n=19, c=8, patches_tuple=(4, 4), patch_size=(4, 4),
              dtype=jnp.float32, tol=1e-5)
    # 3) bf16 inputs (halves HBM bytes; the kernel casts to f32 on-chip).
    _run_case(k2, n=12, c=8, patches_tuple=(4, 4), patch_size=(4, 4),
              dtype=jnp.bfloat16, tol=1e-3)
    print("KERNEL_OK")
</pallas_src>

<mosaic_0001>
module attributes {stable_mosaic.version = 11 : i64} {
  func.func @_mae_partial_slab_kernel(%arg0: i32, %arg1: memref<8x768xf32, #tpu.memory_space<vmem>>, %arg2: memref<8x768xf32, #tpu.memory_space<vmem>>, %arg3: memref<8x1x16xf32, #tpu.memory_space<vmem>>, %arg4: memref<1x1x2xf32, #tpu.memory_space<vmem>>) attributes {dimension_semantics = [#tpu.dimension_semantics<parallel>], iteration_bounds = array<i64: 2>, scalar_prefetch = 0 : i64, scratch_operands = 0 : i64, tpu.core_type = #tpu.core_type<tc>, window_params = [{transform_indices = @transform_0, window_bounds = array<i64: 8, 768>}, {transform_indices = @transform_1, window_bounds = array<i64: 8, 768>}, {transform_indices = @transform_2, window_bounds = array<i64: 8, 1, 16>}, {transform_indices = @transform_3, window_bounds = array<i64: 1, 1, 2>}]} {
    %c0 = arith.constant 0 : index
    %c0_0 = arith.constant 0 : index
    %0 = vector.load %arg1[%c0, %c0_0] : memref<8x768xf32, #tpu.memory_space<vmem>>, vector<8x768xf32>
    %c0_1 = arith.constant 0 : index
    %c0_2 = arith.constant 0 : index
    %1 = vector.load %arg2[%c0_1, %c0_2] : memref<8x768xf32, #tpu.memory_space<vmem>>, vector<8x768xf32>
    %2 = arith.subf %0, %1 : vector<8x768xf32>
    %3 = arith.mulf %2, %2 : vector<8x768xf32>
    %4 = tpu.iota {dimensions = array<i32: 0>} : vector<768x16xi32>
    %5 = tpu.iota {dimensions = array<i32: 1>} : vector<768x16xi32>
    %c48_i32 = arith.constant 48 : i32
    %6 = vector.broadcast %c48_i32 : i32 to vector<768x16xi32>
    %7 = arith.muli %5, %6 : vector<768x16xi32>
    %8 = arith.cmpi sge, %4, %7 : vector<768x16xi32>
    %c48_i32_3 = arith.constant 48 : i32
    %9 = vector.broadcast %c48_i32_3 : i32 to vector<768x16xi32>
    %10 = arith.addi %7, %9 : vector<768x16xi32>
    %11 = arith.cmpi slt, %4, %10 : vector<768x16xi32>
    %12 = arith.andi %8, %11 : vector<768x16xi1>
    %13 = arith.extui %12 : vector<768x16xi1> to vector<768x16xi32>
    %14 = arith.sitofp %13 : vector<768x16xi32> to vector<768x16xf32>
    %cst = arith.constant dense<0.000000e+00> : vector<8x16xf32>
    %15 = tpu.matmul %3, %14, %cst {dimension_numbers = #tpu.dot_dimension_numbers<[1], [0], [0], [1], [0, 0, 1, 1], [], []>} : vector<8x768xf32>, vector<768x16xf32>, vector<8x16xf32> -> vector<8x16xf32>
    %c0_4 = arith.constant 0 : index
    %c0_5 = arith.constant 0 : index
    %c0_6 = arith.constant 0 : index
    %16 = vector.load %arg3[%c0_4, %c0_5, %c0_6] : memref<8x1x16xf32, #tpu.memory_space<vmem>>, vector<8x1x16xf32>
    %17 = vector.shape_cast %16 : vector<8x1x16xf32> to vector<8x16xf32>
    %cst_7 = arith.constant 0.000000e+00 : f32
    %18 = vector.broadcast %cst_7 : f32 to vector<8x16xf32>
    %19 = arith.cmpf ogt, %17, %18 : vector<8x16xf32>
    %cst_8 = arith.constant 0.000000e+00 : f32
    %20 = vector.broadcast %cst_8 : f32 to vector<8x16xf32>
    %21 = arith.select %19, %15, %20 : vector<8x16xi1>, vector<8x16xf32>
    %22 = arith.mulf %21, %17 : vector<8x16xf32>
    %23 = vector.shape_cast %22 : vector<8x16xf32> to vector<1x8x16xf32>
    %cst_9 = arith.constant dense<0.000000e+00> : vector<1xf32>
    %24 = vector.multi_reduction <add>, %23, %cst_9 [1, 2] : vector<1x8x16xf32> to vector<1xf32>
    %25 = vector.shape_cast %24 : vector<1xf32> to vector<1x1x1xf32>
    %26 = vector.extract %25[0, 0, 0] : f32 from vector<1x1x1xf32>
    %27 = vector.broadcast %26 : f32 to vector<1x1x1xf32>
    %c0_10 = arith.constant 0 : index
    %c0_11 = arith.constant 0 : index
    %c0_12 = arith.constant 0 : index
    %28 = vector.load %arg4[%c0_10, %c0_11, %c0_12] : memref<1x1x2xf32, #tpu.memory_space<vmem>>, vector<1x1x1xf32>
    tpu.vector_store %arg4[%c0_10, %c0_11, %c0_12], %27 {strides = array<i32>} : memref<1x1x2xf32, #tpu.memory_space<vmem>>, vector<1x1x1xf32>,
    %29 = vector.shape_cast %17 : vector<8x16xf32> to vector<1x8x16xf32>
    %cst_13 = arith.constant dense<0.000000e+00> : vector<1xf32>
    %30 = vector.multi_reduction <add>, %29, %cst_13 [1, 2] : vector<1x8x16xf32> to vector<1xf32>
    %31 = vector.shape_cast %30 : vector<1xf32> to vector<1x1x1xf32>
    %32 = vector.extract %31[0, 0, 0] : f32 from vector<1x1x1xf32>
    %33 = vector.broadcast %32 : f32 to vector<1x1x1xf32>
    %c0_14 = arith.constant 0 : index
    %c0_15 = arith.constant 0 : index
    %c1 = arith.constant 1 : index
    %34 = vector.load %arg4[%c0_14, %c0_15, %c1] : memref<1x1x2xf32, #tpu.memory_space<vmem>>, vector<1x1x1xf32>
    tpu.vector_store %arg4[%c0_14, %c0_15, %c1], %33 {strides = array<i32>} : memref<1x1x2xf32, #tpu.memory_space<vmem>>, vector<1x1x1xf32>,
    return
  }
  func.func @transform_0(%arg0: i32) -> (i32, i32) {
    %c0_i32 = arith.constant 0 : i32
    %c0_i32_0 = arith.constant 0 : i32
    return %arg0, %c0_i32 : i32, i32
  }
  func.func @transform_1(%arg0: i32) -> (i32, i32) {
    %c0_i32 = arith.constant 0 : i32
    %c0_i32_0 = arith.constant 0 : i32
    return %arg0, %c0_i32 : i32, i32
  }
  func.func @transform_2(%arg0: i32) -> (i32, i32, i32) {
    %c0_i32 = arith.constant 0 : i32
    %c0_i32_0 = arith.constant 0 : i32
    %c0_i32_1 = arith.constant 0 : i32
    return %arg0, %c0_i32, %c0_i32_0 : i32, i32, i32
  }
  func.func @transform_3(%arg0: i32) -> (i32, i32, i32) {
    %c0_i32 = arith.constant 0 : i32
    %c0_i32_0 = arith.constant 0 : i32
    %c0_i32_1 = arith.constant 0 : i32
    return %arg0, %c0_i32, %c0_i32_0 : i32, i32, i32
  }
}

</mosaic_0001>

<llo_original>
// kernel: tpu_custom_call.1
$region0: #{tpu_custom_call.1}
  #allocation0 [shape = 'u32[]', space=smem, size = 0x4, offset = 0x4, fixed_abs, tag = 'smem constant byte address 0x4 - core index']
  #allocation1 [shape = 'u32[72,128]{1,0:T(1,128)}', space=vmem, size = 0x9000, scoped, tag = 'internal scratch']
  %s0 = inlined_call_operand.hbm [shape: f32[11,768], index: 0, kind: input, shape index: {}]
  %s1 = inlined_call_operand.hbm [shape: f32[11,768], index: 1, kind: input, shape index: {}]
  %s2 = inlined_call_operand.hbm [shape: f32[16,1,16], index: 2, kind: input, shape index: {}]
  %s3 = inlined_call_operand.hbm [shape: f32[2,1,2], index: 3, kind: output, shape index: {}]
  %s4 = sld [smem:[#allocation0]]
  $region57: #{tpu_custom_call.1} parent=0
    _
  %s6 = ssub.s32 1, %s4
  %s7 = scalar_select 0, %s6, %s4
  $region1: #{tpu_custom_call.1} parent=0
    #allocation2 [shape = 'u8[49152]{0}', space=vmem, size = 0xc000, scoped, tag = 'input window, operand 0']
    #allocation3 [shape = 's32[2]{0}', space=sflag, size = 0x8, scoped, tag = 'scoped memory for tpu_custom_call.1']
    #allocation4 [shape = 's32[2]{0}', space=sflag, size = 0x8, scoped, tag = 'scoped memory for tpu_custom_call.1']
    #allocation5 [shape = 'u8[49152]{0}', space=vmem, size = 0xc000, scoped, tag = 'input window, operand 1']
    #allocation6 [shape = 's32[2]{0}', space=sflag, size = 0x8, scoped, tag = 'scoped memory for tpu_custom_call.1']
    #allocation7 [shape = 'u8[8192]{0}', space=vmem, size = 0x2000, scoped, tag = 'input window, operand 2']
    #allocation8 [shape = 'u8[1024]{0}', space=vmem, size = 0x400, scoped, tag = 'output window, operand 0']
    %8 = vsyncpa [#allocation3], 0
    %s9 = scalar_lea.sflag [#allocation3], 1
    %10 = vsyncpa %s9, 0
    %11 = vsyncpa [#allocation6], 0
    %s12 = scalar_lea.sflag [#allocation6], 1
    %13 = vsyncpa %s12, 0
    %14 = vsyncpa [#allocation4], 0
    %s15 = scalar_lea.sflag [#allocation4], 1
    %16 = vsyncpa %s15, 0
    loop: start=0, step=1, limit=4
    $region2: #{tpu_custom_call.1} parent=1 // loop_pre_header
      _
    $region3: #{tpu_custom_call.1} parent=1 // loop_header
      %s18 = sphi 0, %s22
      %p19 = scmp.ge.s32.totalorder %s18, 4
      %s28 = sphi 0, %s30
      %s31 = sphi 0, %s28
      %s32 = sphi 0, %s31
      %s48 = sphi 0, %s32
      %s54 = sphi 0, %s56
      %s57 = sphi 0, %s54
      %s58 = sphi 0, %s57
      %s74 = sphi 0, %s58
      %s80 = sphi 0, %s82
      %s83 = sphi 0, %s80
      %s84 = sphi 0, %s83
      %s100 = sphi 0, %s84
      %s106 = sphi 0, %s108
      %s109 = sphi 0, %s106
      %s110 = sphi 0, %s109
      %s126 = sphi 0, %s110
    $region4: #{tpu_custom_call.1} parent=1 // loop_header_branch
      %21 = sbr.rel (%p19) target = $region8
    $region5: #{tpu_custom_call.1} parent=1 // loop_body
      %s23 = ssub.s32 %s18, 1
      %s24 = ssub.s32 %s18, 2
      %s25 = sadd.s32 %s18, 1
      %s26 = ssub.s32 %s18, %s25
      %p27 = scmp.eq.s32.totalorder %s26, 0
      %s29 = sadd.s32 %s28, 1
      %s30 = scalar_select %p27, %s28, %s29
      %p33 = pneg %p27
      %p34 = scmp.eq.s32.totalorder %s18, 1
      %p35 = por %p33, %p34
      %p36 = scmp.ne.s32.totalorder %s28, %s31
      %p37 = scmp.eq.s32.totalorder %s18, 0
      %p38 = por %p36, %p37
      %p39 = scmp.ne.s32.totalorder %s28, %s31
      %p40 = scmp.eq.s32.totalorder %s23, 1
      %p41 = por %p39, %p40
      %p42 = scmp.ne.s32.totalorder %s31, %s32
      %p43 = scmp.eq.s32.totalorder %s23, 0
      %p44 = por %p42, %p43
      %p45 = scmp.ne.s32.totalorder %s31, %s32
      %p46 = scmp.eq.s32.totalorder %s24, 1
      %p47 = por %p45, %p46
      %p49 = scmp.ne.s32.totalorder %s32, %s48
      %p50 = scmp.eq.s32.totalorder %s24, 0
      %p51 = por %p49, %p50
      %s52 = ssub.s32 %s18, %s25
      %p53 = scmp.eq.s32.totalorder %s52, 0
      %s55 = sadd.s32 %s54, 1
      %s56 = scalar_select %p53, %s54, %s55
      %p59 = pneg %p53
      %p60 = scmp.eq.s32.totalorder %s18, 1
      %p61 = por %p59, %p60
      %p62 = scmp.ne.s32.totalorder %s54, %s57
      %p63 = scmp.eq.s32.totalorder %s18, 0
      %p64 = por %p62, %p63
      %p65 = scmp.ne.s32.totalorder %s54, %s57
      %p66 = scmp.eq.s32.totalorder %s23, 1
      %p67 = por %p65, %p66
      %p68 = scmp.ne.s32.totalorder %s57, %s58
      %p69 = scmp.eq.s32.totalorder %s23, 0
      %p70 = por %p68, %p69
      %p71 = scmp.ne.s32.totalorder %s57, %s58
      %p72 = scmp.eq.s32.totalorder %s24, 1
      %p73 = por %p71, %p72
      %p75 = scmp.ne.s32.totalorder %s58, %s74
      %p76 = scmp.eq.s32.totalorder %s24, 0
      %p77 = por %p75, %p76
      %s78 = ssub.s32 %s18, %s25
      %p79 = scmp.eq.s32.totalorder %s78, 0
      %s81 = sadd.s32 %s80, 1
      %s82 = scalar_select %p79, %s80, %s81
      %p85 = pneg %p79
      %p86 = scmp.eq.s32.totalorder %s18, 1
      %p87 = por %p85, %p86
      %p88 = scmp.ne.s32.totalorder %s80, %s83
      %p89 = scmp.eq.s32.totalorder %s18, 0
      %p90 = por %p88, %p89
      %p91 = scmp.ne.s32.totalorder %s80, %s83
      %p92 = scmp.eq.s32.totalorder %s23, 1
      %p93 = por %p91, %p92
      %p94 = scmp.ne.s32.totalorder %s83, %s84
      %p95 = scmp.eq.s32.totalorder %s23, 0
      %p96 = por %p94, %p95
      %p97 = scmp.ne.s32.totalorder %s83, %s84
      %p98 = scmp.eq.s32.totalorder %s24, 1
      %p99 = por %p97, %p98
      %p101 = scmp.ne.s32.totalorder %s84, %s100
      %p102 = scmp.eq.s32.totalorder %s24, 0
      %p103 = por %p101, %p102
      %s104 = ssub.s32 %s18, %s25
      %p105 = scmp.eq.s32.totalorder %s104, 0
      %s107 = sadd.s32 %s106, 1
      %s108 = scalar_select %p105, %s106, %s107
      %p111 = pneg %p105
      %p112 = scmp.eq.s32.totalorder %s18, 1
      %p113 = por %p111, %p112
      %p114 = scmp.ne.s32.totalorder %s106, %s109
      %p115 = scmp.eq.s32.totalorder %s18, 0
      %p116 = por %p114, %p115
      %p117 = scmp.ne.s32.totalorder %s106, %s109
      %p118 = scmp.eq.s32.totalorder %s23, 1
      %p119 = por %p117, %p118
      %p120 = scmp.ne.s32.totalorder %s109, %s110
      %p121 = scmp.eq.s32.totalorder %s23, 0
      %p122 = por %p120, %p121
      %p123 = scmp.ne.s32.totalorder %s109, %s110
      %p124 = scmp.eq.s32.totalorder %s24, 1
      %p125 = por %p123, %p124
      %p127 = scmp.ne.s32.totalorder %s110, %s126
      %p128 = scmp.eq.s32.totalorder %s24, 0
      %p129 = por %p127, %p128
      %p130 = scmp.le.s32.totalorder 1, %s18
      %p131 = scmp.lt.s32.totalorder %s18, 3
      %p132 = pnand %p130, %p131
      %p133 = pneg %p132
      // Predicated region
      $region9: #{tpu_custom_call.1} parent=5 // pred_check
        _
      $region10: #{tpu_custom_call.1} parent=5 // pred_check_branch
        %135 = sbr.rel (%p132) target = $region12
      $region11: #{tpu_custom_call.1} parent=5 // pred_region
        %s136 = ssub.s32 %s18, 1
      $region12: #{tpu_custom_call.1} parent=5 // pred_fallthru
        _
      %p137 = scmp.lt.s32.totalorder %s18, 2
      // Predicated region
      $region13: #{tpu_custom_call.1} parent=5 // pred_check
        %p138 = pneg %p137
      $region14: #{tpu_custom_call.1} parent=5 // pred_check_branch
        %140 = sbr.rel (%p138) target = $region16
      $region15: #{tpu_custom_call.1} parent=5 // pred_region
        // Predicated region
        $region17: #{tpu_custom_call.1} parent=15 // pred_check
          %p141 = pneg %p38
        $region18: #{tpu_custom_call.1} parent=15 // pred_check_branch
          %143 = sbr.rel (%p141) target = $region20
        $region19: #{tpu_custom_call.1} parent=15 // pred_region
          %s144 = sand.u32 %s28, 1
          %s145 = scalar_lea.sflag [#allocation3], %s144
          %s146 = sand.u32 %s28, 1
          %s147 = smul.addr %s146, 48
          %s148 = scalar_lea.vmem [#allocation2], %s147
          %150 = vsyncadd %s145, 0
          %s151 = smul.addr %s18, 6
          %s152 = smul.addr %s151, 8
          %s153 = scalar_lea.hbm %s0, %s152
          %s155 = sshll.u32 %s153, 4
          %s156 = int_to_ptr.hbm [resolvable:$true] %s155
          %s157 = sshll.u32 %s148, 4
          %s158 = int_to_ptr.vmem [resolvable:$true] %s157
          %160 = dma.hbm_to_vmem [thread:$0]  %s156, 768, %s158, %s145
        $region20: #{tpu_custom_call.1} parent=15 // pred_fallthru
          _
        // Predicated region
        $region21: #{tpu_custom_call.1} parent=15 // pred_check
          %p161 = pneg %p64
        $region22: #{tpu_custom_call.1} parent=15 // pred_check_branch
          %163 = sbr.rel (%p161) target = $region24
        $region23: #{tpu_custom_call.1} parent=15 // pred_region
          %s164 = sand.u32 %s18, 1
          %s165 = scalar_lea.sflag [#allocation6], %s164
          %s166 = sand.u32 %s54, 1
          %s167 = smul.addr %s166, 48
          %s168 = scalar_lea.vmem [#allocation5], %s167
          %170 = vsyncadd %s165, 0
          %s171 = smul.addr %s18, 6
          %s172 = smul.addr %s171, 8
          %s173 = scalar_lea.hbm %s1, %s172
          %s175 = sshll.u32 %s173, 4
          %s176 = int_to_ptr.hbm [resolvable:$true] %s175
          %s177 = sshll.u32 %s168, 4
          %s178 = int_to_ptr.vmem [resolvable:$true] %s177
          %180 = dma.hbm_to_vmem [thread:$0]  %s176, 768, %s178, %s165
        $region24: #{tpu_custom_call.1} parent=15 // pred_fallthru
          _
        // Predicated region
        $region25: #{tpu_custom_call.1} parent=15 // pred_check
          %p181 = pneg %p90
        $region26: #{tpu_custom_call.1} parent=15 // pred_check_branch
          %183 = sbr.rel (%p181) target = $region28
        $region27: #{tpu_custom_call.1} parent=15 // pred_region
          %s184 = sand.u32 %s18, 1
          %s185 = scalar_lea.sflag [#allocation6], %s184
          %s186 = sand.u32 %s80, 1
          %s187 = smul.addr %s186, 8
          %s188 = scalar_lea.vmem [#allocation7], %s187
          %s189 = smul.u32 8, %s18
          %191 = vsyncadd %s185, 0
          %s192 = scalar_lea.hbm %s2, %s189
          %s193 = sshll.u32 %s192, 4
          %s194 = int_to_ptr.hbm [resolvable:$true] %s193
          %s195 = sshll.u32 %s188, 4
          %s196 = int_to_ptr.vmem [resolvable:$true] %s195
          %201 = dma.hbm_to_vmem [thread:$0]  %s194, 128, %s196, %s185, 16, 16, 1
        $region28: #{tpu_custom_call.1} parent=15 // pred_fallthru
          _
      $region16: #{tpu_custom_call.1} parent=5 // pred_fallthru
        _
      %p202 = scmp.le.s32.totalorder 1, %s18
      %p203 = scmp.lt.s32.totalorder %s18, 3
      %p204 = pnand %p202, %p203
      %p205 = pneg %p204
      // Predicated region
      $region29: #{tpu_custom_call.1} parent=5 // pred_check
        _
      $region30: #{tpu_custom_call.1} parent=5 // pred_check_branch
        %207 = sbr.rel (%p204) target = $region32
      $region31: #{tpu_custom_call.1} parent=5 // pred_region
        %s208 = ssub.s32 %s18, 1
        %s209 = sand.u32 %s31, 1
        %s210 = scalar_lea.sflag [#allocation3], %s209
        %s211 = sand.u32 %s31, 1
        %s212 = smul.addr %s211, 48
        %s213 = scalar_lea.vmem [#allocation2], %s212
        // Predicated region
        $region33: #{tpu_custom_call.1} parent=31 // pred_check
          %p214 = pneg %p44
        $region34: #{tpu_custom_call.1} parent=31 // pred_check_branch
          %216 = sbr.rel (%p214) target = $region36
        $region35: #{tpu_custom_call.1} parent=31 // pred_region
          %218 = dma.done %s210, 768
        $region36: #{tpu_custom_call.1} parent=31 // pred_fallthru
          _
        %s219 = sand.u32 %s23, 1
        %s220 = scalar_lea.sflag [#allocation6], %s219
        %s221 = sand.u32 %s57, 1
        %s222 = smul.addr %s221, 48
        %s223 = scalar_lea.vmem [#allocation5], %s222
        // Predicated region
        $region37: #{tpu_custom_call.1} parent=31 // pred_check
          %p224 = pneg %p70
        $region38: #{tpu_custom_call.1} parent=31 // pred_check_branch
          %226 = sbr.rel (%p224) target = $region40
        $region39: #{tpu_custom_call.1} parent=31 // pred_region
          %228 = dma.done %s220, 768
        $region40: #{tpu_custom_call.1} parent=31 // pred_fallthru
          _
        %s229 = sand.u32 %s23, 1
        %s230 = scalar_lea.sflag [#allocation6], %s229
        %s231 = sand.u32 %s83, 1
        %s232 = smul.addr %s231, 8
        %s233 = scalar_lea.vmem [#allocation7], %s232
        // Predicated region
        $region41: #{tpu_custom_call.1} parent=31 // pred_check
          %p234 = pneg %p96
        $region42: #{tpu_custom_call.1} parent=31 // pred_check_branch
          %236 = sbr.rel (%p234) target = $region44
        $region43: #{tpu_custom_call.1} parent=31 // pred_region
          %238 = dma.done %s230, 128
        $region44: #{tpu_custom_call.1} parent=31 // pred_fallthru
          _
        %s239 = sand.u32 %s31, 1
        %s240 = scalar_lea.sflag [#allocation3], %s239
        %s241 = sand.u32 %s31, 1
        %s242 = smul.addr %s241, 48
        %s243 = scalar_lea.vmem [#allocation2], %s242
        %p244 = pneg %p44
        %p245 = pneg %p41
        %s246 = sand.u32 %s23, 1
        %s247 = scalar_lea.sflag [#allocation6], %s246
        %s248 = sand.u32 %s57, 1
        %s249 = smul.addr %s248, 48
        %s250 = scalar_lea.vmem [#allocation5], %s249
        %p251 = pneg %p70
        %p252 = pneg %p67
        %s253 = sand.u32 %s23, 1
        %s254 = scalar_lea.sflag [#allocation6], %s253
        %s255 = sand.u32 %s83, 1
        %s256 = smul.addr %s255, 8
        %s257 = scalar_lea.vmem [#allocation7], %s256
        %p258 = pneg %p96
        %p259 = pneg %p93
        %p260 = pneg %p122
        %p261 = pneg %p119
        %s262 = sand.u32 %s109, 1
        %s263 = scalar_lea.sflag [#allocation4], %s262
        %s264 = sand.u32 %s109, 1
        %s265 = scalar_lea.vmem [#allocation8], %s264
        %s266 = smul.u32 8, %s23
        %v267 = vld [vmem:[%s213] sm:$0xff]
        %v268 = vld [vmem:[%s213 + $0x8] sm:$0xff]
        %v269 = vld [vmem:[%s213 + $0x10] sm:$0xff]
        %v270 = vld [vmem:[%s213 + $0x18] sm:$0xff]
        %v271 = vld [vmem:[%s213 + $0x20] sm:$0xff]
        %v272 = vld [vmem:[%s213 + $0x28] sm:$0xff]
        %v273 = vld [vmem:[%s223] sm:$0xff]
        %v274 = vld [vmem:[%s223 + $0x8] sm:$0xff]
        %v275 = vld [vmem:[%s223 + $0x10] sm:$0xff]
        %v276 = vld [vmem:[%s223 + $0x18] sm:$0xff]
        %v277 = vld [vmem:[%s223 + $0x20] sm:$0xff]
        %v278 = vld [vmem:[%s223 + $0x28] sm:$0xff]
        %v279 = vsub.f32 %v267, %v273
        %v280 = vsub.f32 %v268, %v274
        %v281 = vsub.f32 %v269, %v275
        %v282 = vsub.f32 %v270, %v276
        %v283 = vsub.f32 %v271, %v277
        %v284 = vsub.f32 %v272, %v278
        %v285 = vmul.f32 %v279, %v279
        %v286 = vmul.f32 %v280, %v280
        %v287 = vmul.f32 %v281, %v281
        %v288 = vmul.f32 %v282, %v282
        %v289 = vmul.f32 %v283, %v283
        %v290 = vmul.f32 %v284, %v284
        %v291 = vlaneseq
        %v292 = vshrl.u32 %v291, 7
        %v293 = vadd.s32 %v292, 8
        %v294 = vadd.s32 %v292, 16
        %v295 = vadd.s32 %v292, 24
        %v296 = vadd.s32 %v292, 32
        %v297 = vadd.s32 %v292, 40
        %v298 = vadd.s32 %v292, 48
        %v299 = vadd.s32 %v292, 56
        %v300 = vadd.s32 %v292, 64
        %v301 = vadd.s32 %v292, 72
        %v302 = vadd.s32 %v292, 80
        %v303 = vadd.s32 %v292, 88
        %v304 = vadd.s32 %v292, 96
        %v305 = vadd.s32 %v292, 104
        %v306 = vadd.s32 %v292, 112
        %v307 = vadd.s32 %v292, 120
        %v308 = vadd.s32 %v292, 128
        %v309 = vadd.s32 %v292, 136
        %v310 = vadd.s32 %v292, 144
        %v311 = vadd.s32 %v292, 152
        %v312 = vadd.s32 %v292, 160
        %v313 = vadd.s32 %v292, 168
        %v314 = vadd.s32 %v292, 176
        %v315 = vadd.s32 %v292, 184
        %v316 = vadd.s32 %v292, 192
        %v317 = vadd.s32 %v292, 200
        %v318 = vadd.s32 %v292, 208
        %v319 = vadd.s32 %v292, 216
        %v320 = vadd.s32 %v292, 224
        %v321 = vadd.s32 %v292, 232
        %v322 = vadd.s32 %v292, 240
        %v323 = vadd.s32 %v292, 248
        %v324 = vadd.s32 %v292, 256
        %v325 = vadd.s32 %v292, 264
        %v326 = vadd.s32 %v292, 272
        %v327 = vadd.s32 %v292, 280
        %v328 = vadd.s32 %v292, 288
        %v329 = vadd.s32 %v292, 296
        %v330 = vadd.s32 %v292, 304
        %v331 = vadd.s32 %v292, 312
        %v332 = vadd.s32 %v292, 320
        %v333 = vadd.s32 %v292, 328
        %v334 = vadd.s32 %v292, 336
        %v335 = vadd.s32 %v292, 344
        %v336 = vadd.s32 %v292, 352
        %v337 = vadd.s32 %v292, 360
        %v338 = vadd.s32 %v292, 368
        %v339 = vadd.s32 %v292, 376
        %v340 = vadd.s32 %v292, 384
        %v341 = vadd.s32 %v292, 392
        %v342 = vadd.s32 %v292, 400
        %v343 = vadd.s32 %v292, 408
        %v344 = vadd.s32 %v292, 416
        %v345 = vadd.s32 %v292, 424
        %v346 = vadd.s32 %v292, 432
        %v347 = vadd.s32 %v292, 440
        %v348 = vadd.s32 %v292, 448
        %v349 = vadd.s32 %v292, 456
        %v350 = vadd.s32 %v292, 464
        %v351 = vadd.s32 %v292, 472
        %v352 = vadd.s32 %v292, 480
        %v353 = vadd.s32 %v292, 488
        %v354 = vadd.s32 %v292, 496
        %v355 = vadd.s32 %v292, 504
        %v356 = vadd.s32 %v292, 512
        %v357 = vadd.s32 %v292, 520
        %v358 = vadd.s32 %v292, 528
        %v359 = vadd.s32 %v292, 536
        %v360 = vadd.s32 %v292, 544
        %v361 = vadd.s32 %v292, 552
        %v362 = vadd.s32 %v292, 560
        %v363 = vadd.s32 %v292, 568
        %v364 = vadd.s32 %v292, 576
        %v365 = vadd.s32 %v292, 584
        %v366 = vadd.s32 %v292, 592
        %v367 = vadd.s32 %v292, 600
        %v368 = vadd.s32 %v292, 608
        %v369 = vadd.s32 %v292, 616
        %v370 = vadd.s32 %v292, 624
        %v371 = vadd.s32 %v292, 632
        %v372 = vadd.s32 %v292, 640
        %v373 = vadd.s32 %v292, 648
        %v374 = vadd.s32 %v292, 656
        %v375 = vadd.s32 %v292, 664
        %v376 = vadd.s32 %v292, 672
        %v377 = vadd.s32 %v292, 680
        %v378 = vadd.s32 %v292, 688
        %v379 = vadd.s32 %v292, 696
        %v380 = vadd.s32 %v292, 704
        %v381 = vadd.s32 %v292, 712
        %v382 = vadd.s32 %v292, 720
        %v383 = vadd.s32 %v292, 728
        %v384 = vadd.s32 %v292, 736
        %v385 = vadd.s32 %v292, 744
        %v386 = vadd.s32 %v292, 752
        %v387 = vadd.s32 %v292, 760
        %v388 = vlaneseq
        %v389 = vand.u32 %v388, 127
        %v390 = vmul.u32 %v389, 48
        %vm391 = vcmp.ge.s32.totalorder %v292, %v390
        %vm392 = vcmp.ge.s32.totalorder %v293, %v390
        %vm393 = vcmp.ge.s32.totalorder %v294, %v390
        %vm394 = vcmp.ge.s32.totalorder %v295, %v390
        %vm395 = vcmp.ge.s32.totalorder %v296, %v390
        %vm396 = vcmp.ge.s32.totalorder %v297, %v390
        %vm397 = vcmp.ge.s32.totalorder %v298, %v390
        %vm398 = vcmp.ge.s32.totalorder %v299, %v390
        %vm399 = vcmp.ge.s32.totalorder %v300, %v390
        %vm400 = vcmp.ge.s32.totalorder %v301, %v390
        %vm401 = vcmp.ge.s32.totalorder %v302, %v390
        %vm402 = vcmp.ge.s32.totalorder %v303, %v390
        %vm403 = vcmp.ge.s32.totalorder %v304, %v390
        %vm404 = vcmp.ge.s32.totalorder %v305, %v390
        %vm405 = vcmp.ge.s32.totalorder %v306, %v390
        %vm406 = vcmp.ge.s32.totalorder %v307, %v390
        %vm407 = vcmp.ge.s32.totalorder %v308, %v390
        %vm408 = vcmp.ge.s32.totalorder %v309, %v390
        %vm409 = vcmp.ge.s32.totalorder %v310, %v390
        %vm410 = vcmp.ge.s32.totalorder %v311, %v390
        %vm411 = vcmp.ge.s32.totalorder %v312, %v390
        %vm412 = vcmp.ge.s32.totalorder %v313, %v390
        %vm413 = vcmp.ge.s32.totalorder %v314, %v390
        %vm414 = vcmp.ge.s32.totalorder %v315, %v390
        %vm415 = vcmp.ge.s32.totalorder %v316, %v390
        %vm416 = vcmp.ge.s32.totalorder %v317, %v390
        %vm417 = vcmp.ge.s32.totalorder %v318, %v390
        %vm418 = vcmp.ge.s32.totalorder %v319, %v390
        %vm419 = vcmp.ge.s32.totalorder %v320, %v390
        %vm420 = vcmp.ge.s32.totalorder %v321, %v390
        %vm421 = vcmp.ge.s32.totalorder %v322, %v390
        %vm422 = vcmp.ge.s32.totalorder %v323, %v390
        %vm423 = vcmp.ge.s32.totalorder %v324, %v390
        %vm424 = vcmp.ge.s32.totalorder %v325, %v390
        %vm425 = vcmp.ge.s32.totalorder %v326, %v390
        %vm426 = vcmp.ge.s32.totalorder %v327, %v390
        %vm427 = vcmp.ge.s32.totalorder %v328, %v390
        %vm428 = vcmp.ge.s32.totalorder %v329, %v390
        %vm429 = vcmp.ge.s32.totalorder %v330, %v390
        %vm430 = vcmp.ge.s32.totalorder %v331, %v390
        %vm431 = vcmp.ge.s32.totalorder %v332, %v390
        %vm432 = vcmp.ge.s32.totalorder %v333, %v390
        %vm433 = vcmp.ge.s32.totalorder %v334, %v390
        %vm434 = vcmp.ge.s32.totalorder %v335, %v390
        %vm435 = vcmp.ge.s32.totalorder %v336, %v390
        %vm436 = vcmp.ge.s32.totalorder %v337, %v390
        %vm437 = vcmp.ge.s32.totalorder %v338, %v390
        %vm438 = vcmp.ge.s32.totalorder %v339, %v390
        %vm439 = vcmp.ge.s32.totalorder %v340, %v390
        %vm440 = vcmp.ge.s32.totalorder %v341, %v390
        %vm441 = vcmp.ge.s32.totalorder %v342, %v390
        %vm442 = vcmp.ge.s32.totalorder %v343, %v390
        %vm443 = vcmp.ge.s32.totalorder %v344, %v390
        %vm444 = vcmp.ge.s32.totalorder %v345, %v390
        %vm445 = vcmp.ge.s32.totalorder %v346, %v390
        %vm446 = vcmp.ge.s32.totalorder %v347, %v390
        %vm447 = vcmp.ge.s32.totalorder %v348, %v390
        %vm448 = vcmp.ge.s32.totalorder %v349, %v390
        %vm449 = vcmp.ge.s32.totalorder %v350, %v390
        %vm450 = vcmp.ge.s32.totalorder %v351, %v390
        %vm451 = vcmp.ge.s32.totalorder %v352, %v390
        %vm452 = vcmp.ge.s32.totalorder %v353, %v390
        %vm453 = vcmp.ge.s32.totalorder %v354, %v390
        %vm454 = vcmp.ge.s32.totalorder %v355, %v390
        %vm455 = vcmp.ge.s32.totalorder %v356, %v390
        %vm456 = vcmp.ge.s32.totalorder %v357, %v390
        %vm457 = vcmp.ge.s32.totalorder %v358, %v390
        %vm458 = vcmp.ge.s32.totalorder %v359, %v390
        %vm459 = vcmp.ge.s32.totalorder %v360, %v390
        %vm460 = vcmp.ge.s32.totalorder %v361, %v390
        %vm461 = vcmp.ge.s32.totalorder %v362, %v390
        %vm462 = vcmp.ge.s32.totalorder %v363, %v390
        %vm463 = vcmp.ge.s32.totalorder %v364, %v390
        %vm464 = vcmp.ge.s32.totalorder %v365, %v390
        %vm465 = vcmp.ge.s32.totalorder %v366, %v390
        %vm466 = vcmp.ge.s32.totalorder %v367, %v390
        %vm467 = vcmp.ge.s32.totalorder %v368, %v390
        %vm468 = vcmp.ge.s32.totalorder %v369, %v390
        %vm469 = vcmp.ge.s32.totalorder %v370, %v390
        %vm470 = vcmp.ge.s32.totalorder %v371, %v390
        %vm471 = vcmp.ge.s32.totalorder %v372, %v390
        %vm472 = vcmp.ge.s32.totalorder %v373, %v390
        %vm473 = vcmp.ge.s32.totalorder %v374, %v390
        %vm474 = vcmp.ge.s32.totalorder %v375, %v390
        %vm475 = vcmp.ge.s32.totalorder %v376, %v390
        %vm476 = vcmp.ge.s32.totalorder %v377, %v390
        %vm477 = vcmp.ge.s32.totalorder %v378, %v390
        %vm478 = vcmp.ge.s32.totalorder %v379, %v390
        %vm479 = vcmp.ge.s32.totalorder %v380, %v390
        %vm480 = vcmp.ge.s32.totalorder %v381, %v390
        %vm481 = vcmp.ge.s32.totalorder %v382, %v390
        %vm482 = vcmp.ge.s32.totalorder %v383, %v390
        %vm483 = vcmp.ge.s32.totalorder %v384, %v390
        %vm484 = vcmp.ge.s32.totalorder %v385, %v390
        %vm485 = vcmp.ge.s32.totalorder %v386, %v390
        %vm486 = vcmp.ge.s32.totalorder %v387, %v390
        %v487 = vadd.s32 %v390, 48
        %vm488 = vcmp.lt.s32.totalorder %v292, %v487
        %vm489 = vcmp.lt.s32.totalorder %v293, %v487
        %vm490 = vcmp.lt.s32.totalorder %v294, %v487
        %vm491 = vcmp.lt.s32.totalorder %v295, %v487
        %vm492 = vcmp.lt.s32.totalorder %v296, %v487
        %vm493 = vcmp.lt.s32.totalorder %v297, %v487
        %vm494 = vcmp.lt.s32.totalorder %v298, %v487
        %vm495 = vcmp.lt.s32.totalorder %v299, %v487
        %vm496 = vcmp.lt.s32.totalorder %v300, %v487
        %vm497 = vcmp.lt.s32.totalorder %v301, %v487
        %vm498 = vcmp.lt.s32.totalorder %v302, %v487
        %vm499 = vcmp.lt.s32.totalorder %v303, %v487
        %vm500 = vcmp.lt.s32.totalorder %v304, %v487
        %vm501 = vcmp.lt.s32.totalorder %v305, %v487
        %vm502 = vcmp.lt.s32.totalorder %v306, %v487
        %vm503 = vcmp.lt.s32.totalorder %v307, %v487
        %vm504 = vcmp.lt.s32.totalorder %v308, %v487
        %vm505 = vcmp.lt.s32.totalorder %v309, %v487
        %vm506 = vcmp.lt.s32.totalorder %v310, %v487
        %vm507 = vcmp.lt.s32.totalorder %v311, %v487
        %vm508 = vcmp.lt.s32.totalorder %v312, %v487
        %vm509 = vcmp.lt.s32.totalorder %v313, %v487
        %vm510 = vcmp.lt.s32.totalorder %v314, %v487
        %vm511 = vcmp.lt.s32.totalorder %v315, %v487
        %vm512 = vcmp.lt.s32.totalorder %v316, %v487
        %vm513 = vcmp.lt.s32.totalorder %v317, %v487
        %vm514 = vcmp.lt.s32.totalorder %v318, %v487
        %vm515 = vcmp.lt.s32.totalorder %v319, %v487
        %vm516 = vcmp.lt.s32.totalorder %v320, %v487
        %vm517 = vcmp.lt.s32.totalorder %v321, %v487
        %vm518 = vcmp.lt.s32.totalorder %v322, %v487
        %vm519 = vcmp.lt.s32.totalorder %v323, %v487
        %vm520 = vcmp.lt.s32.totalorder %v324, %v487
        %vm521 = vcmp.lt.s32.totalorder %v325, %v487
        %vm522 = vcmp.lt.s32.totalorder %v326, %v487
        %vm523 = vcmp.lt.s32.totalorder %v327, %v487
        %vm524 = vcmp.lt.s32.totalorder %v328, %v487
        %vm525 = vcmp.lt.s32.totalorder %v329, %v487
        %vm526 = vcmp.lt.s32.totalorder %v330, %v487
        %vm527 = vcmp.lt.s32.totalorder %v331, %v487
        %vm528 = vcmp.lt.s32.totalorder %v332, %v487
        %vm529 = vcmp.lt.s32.totalorder %v333, %v487
        %vm530 = vcmp.lt.s32.totalorder %v334, %v487
        %vm531 = vcmp.lt.s32.totalorder %v335, %v487
        %vm532 = vcmp.lt.s32.totalorder %v336, %v487
        %vm533 = vcmp.lt.s32.totalorder %v337, %v487
        %vm534 = vcmp.lt.s32.totalorder %v338, %v487
        %vm535 = vcmp.lt.s32.totalorder %v339, %v487
        %vm536 = vcmp.lt.s32.totalorder %v340, %v487
        %vm537 = vcmp.lt.s32.totalorder %v341, %v487
        %vm538 = vcmp.lt.s32.totalorder %v342, %v487
        %vm539 = vcmp.lt.s32.totalorder %v343, %v487
        %vm540 = vcmp.lt.s32.totalorder %v344, %v487
        %vm541 = vcmp.lt.s32.totalorder %v345, %v487
        %vm542 = vcmp.lt.s32.totalorder %v346, %v487
        %vm543 = vcmp.lt.s32.totalorder %v347, %v487
        %vm544 = vcmp.lt.s32.totalorder %v348, %v487
        %vm545 = vcmp.lt.s32.totalorder %v349, %v487
        %vm546 = vcmp.lt.s32.totalorder %v350, %v487
        %vm547 = vcmp.lt.s32.totalorder %v351, %v487
        %vm548 = vcmp.lt.s32.totalorder %v352, %v487
        %vm549 = vcmp.lt.s32.totalorder %v353, %v487
        %vm550 = vcmp.lt.s32.totalorder %v354, %v487
        %vm551 = vcmp.lt.s32.totalorder %v355, %v487
        %vm552 = vcmp.lt.s32.totalorder %v356, %v487
        %vm553 = vcmp.lt.s32.totalorder %v357, %v487
        %vm554 = vcmp.lt.s32.totalorder %v358, %v487
        %vm555 = vcmp.lt.s32.totalorder %v359, %v487
        %vm556 = vcmp.lt.s32.totalorder %v360, %v487
        %vm557 = vcmp.lt.s32.totalorder %v361, %v487
        %vm558 = vcmp.lt.s32.totalorder %v362, %v487
        %vm559 = vcmp.lt.s32.totalorder %v363, %v487
        %vm560 = vcmp.lt.s32.totalorder %v364, %v487
        %vm561 = vcmp.lt.s32.totalorder %v365, %v487
        %vm562 = vcmp.lt.s32.totalorder %v366, %v487
        %vm563 = vcmp.lt.s32.totalorder %v367, %v487
        %vm564 = vcmp.lt.s32.totalorder %v368, %v487
        %vm565 = vcmp.lt.s32.totalorder %v369, %v487
        %vm566 = vcmp.lt.s32.totalorder %v370, %v487
        %vm567 = vcmp.lt.s32.totalorder %v371, %v487
        %vm568 = vcmp.lt.s32.totalorder %v372, %v487
        %vm569 = vcmp.lt.s32.totalorder %v373, %v487
        %vm570 = vcmp.lt.s32.totalorder %v374, %v487
        %vm571 = vcmp.lt.s32.totalorder %v375, %v487
        %vm572 = vcmp.lt.s32.totalorder %v376, %v487
        %vm573 = vcmp.lt.s32.totalorder %v377, %v487
        %vm574 = vcmp.lt.s32.totalorder %v378, %v487
        %vm575 = vcmp.lt.s32.totalorder %v379, %v487
        %vm576 = vcmp.lt.s32.totalorder %v380, %v487
        %vm577 = vcmp.lt.s32.totalorder %v381, %v487
        %vm578 = vcmp.lt.s32.totalorder %v382, %v487
        %vm579 = vcmp.lt.s32.totalorder %v383, %v487
        %vm580 = vcmp.lt.s32.totalorder %v384, %v487
        %vm581 = vcmp.lt.s32.totalorder %v385, %v487
        %vm582 = vcmp.lt.s32.totalorder %v386, %v487
        %vm583 = vcmp.lt.s32.totalorder %v387, %v487
        %vm584 = vmand %vm391, %vm488
        %vm585 = vmand %vm392, %vm489
        %vm586 = vmand %vm393, %vm490
        %vm587 = vmand %vm394, %vm491
        %vm588 = vmand %vm395, %vm492
        %vm589 = vmand %vm396, %vm493
        %vm590 = vmand %vm397, %vm494
        %vm591 = vmand %vm398, %vm495
        %vm592 = vmand %vm399, %vm496
        %vm593 = vmand %vm400, %vm497
        %vm594 = vmand %vm401, %vm498
        %vm595 = vmand %vm402, %vm499
        %vm596 = vmand %vm403, %vm500
        %vm597 = vmand %vm404, %vm501
        %vm598 = vmand %vm405, %vm502
        %vm599 = vmand %vm406, %vm503
        %vm600 = vmand %vm407, %vm504
        %vm601 = vmand %vm408, %vm505
        %vm602 = vmand %vm409, %vm506
        %vm603 = vmand %vm410, %vm507
        %vm604 = vmand %vm411, %vm508
        %vm605 = vmand %vm412, %vm509
        %vm606 = vmand %vm413, %vm510
        %vm607 = vmand %vm414, %vm511
        %vm608 = vmand %vm415, %vm512
        %vm609 = vmand %vm416, %vm513
        %vm610 = vmand %vm417, %vm514
        %vm611 = vmand %vm418, %vm515
        %vm612 = vmand %vm419, %vm516
        %vm613 = vmand %vm420, %vm517
        %vm614 = vmand %vm421, %vm518
        %vm615 = vmand %vm422, %vm519
        %vm616 = vmand %vm423, %vm520
        %vm617 = vmand %vm424, %vm521
        %vm618 = vmand %vm425, %vm522
        %vm619 = vmand %vm426, %vm523
        %vm620 = vmand %vm427, %vm524
        %vm621 = vmand %vm428, %vm525
        %vm622 = vmand %vm429, %vm526
        %vm623 = vmand %vm430, %vm527
        %vm624 = vmand %vm431, %vm528
        %vm625 = vmand %vm432, %vm529
        %vm626 = vmand %vm433, %vm530
        %vm627 = vmand %vm434, %vm531
        %vm628 = vmand %vm435, %vm532
        %vm629 = vmand %vm436, %vm533
        %vm630 = vmand %vm437, %vm534
        %vm631 = vmand %vm438, %vm535
        %vm632 = vmand %vm439, %vm536
        %vm633 = vmand %vm440, %vm537
        %vm634 = vmand %vm441, %vm538
        %vm635 = vmand %vm442, %vm539
        %vm636 = vmand %vm443, %vm540
        %vm637 = vmand %vm444, %vm541
        %vm638 = vmand %vm445, %vm542
        %vm639 = vmand %vm446, %vm543
        %vm640 = vmand %vm447, %vm544
        %vm641 = vmand %vm448, %vm545
        %vm642 = vmand %vm449, %vm546
        %vm643 = vmand %vm450, %vm547
        %vm644 = vmand %vm451, %vm548
        %vm645 = vmand %vm452, %vm549
        %vm646 = vmand %vm453, %vm550
        %vm647 = vmand %vm454, %vm551
        %vm648 = vmand %vm455, %vm552
        %vm649 = vmand %vm456, %vm553
        %vm650 = vmand %vm457, %vm554
        %vm651 = vmand %vm458, %vm555
        %vm652 = vmand %vm459, %vm556
        %vm653 = vmand %vm460, %vm557
        %vm654 = vmand %vm461, %vm558
        %vm655 = vmand %vm462, %vm559
        %vm656 = vmand %vm463, %vm560
        %vm657 = vmand %vm464, %vm561
        %vm658 = vmand %vm465, %vm562
        %vm659 = vmand %vm466, %vm563
        %vm660 = vmand %vm467, %vm564
        %vm661 = vmand %vm468, %vm565
        %vm662 = vmand %vm469, %vm566
        %vm663 = vmand %vm470, %vm567
        %vm664 = vmand %vm471, %vm568
        %vm665 = vmand %vm472, %vm569
        %vm666 = vmand %vm473, %vm570
        %vm667 = vmand %vm474, %vm571
        %vm668 = vmand %vm475, %vm572
        %vm669 = vmand %vm476, %vm573
        %vm670 = vmand %vm477, %vm574
        %vm671 = vmand %vm478, %vm575
        %vm672 = vmand %vm479, %vm576
        %vm673 = vmand %vm480, %vm577
        %vm674 = vmand %vm481, %vm578
        %vm675 = vmand %vm482, %vm579
        %vm676 = vmand %vm483, %vm580
        %vm677 = vmand %vm484, %vm581
        %vm678 = vmand %vm485, %vm582
        %vm679 = vmand %vm486, %vm583
        %v680 = vsel %vm584, 1, 0
        %v681 = vsel %vm585, 1, 0
        %v682 = vsel %vm586, 1, 0
        %v683 = vsel %vm587, 1, 0
        %v684 = vsel %vm588, 1, 0
        %v685 = vsel %vm589, 1, 0
        %v686 = vsel %vm590, 1, 0
        %v687 = vsel %vm591, 1, 0
        %v688 = vsel %vm592, 1, 0
        %v689 = vsel %vm593, 1, 0
        %v690 = vsel %vm594, 1, 0
        %v691 = vsel %vm595, 1, 0
        %v692 = vsel %vm596, 1, 0
        %v693 = vsel %vm597, 1, 0
        %v694 = vsel %vm598, 1, 0
        %v695 = vsel %vm599, 1, 0
        %v696 = vsel %vm600, 1, 0
        %v697 = vsel %vm601, 1, 0
        %v698 = vsel %vm602, 1, 0
        %v699 = vsel %vm603, 1, 0
        %v700 = vsel %vm604, 1, 0
        %v701 = vsel %vm605, 1, 0
        %v702 = vsel %vm606, 1, 0
        %v703 = vsel %vm607, 1, 0
        %v704 = vsel %vm608, 1, 0
        %v705 = vsel %vm609, 1, 0
        %v706 = vsel %vm610, 1, 0
        %v707 = vsel %vm611, 1, 0
        %v708 = vsel %vm612, 1, 0
        %v709 = vsel %vm613, 1, 0
        %v710 = vsel %vm614, 1, 0
        %v711 = vsel %vm615, 1, 0
        %v712 = vsel %vm616, 1, 0
        %v713 = vsel %vm617, 1, 0
        %v714 = vsel %vm618, 1, 0
        %v715 = vsel %vm619, 1, 0
        %v716 = vsel %vm620, 1, 0
        %v717 = vsel %vm621, 1, 0
        %v718 = vsel %vm622, 1, 0
        %v719 = vsel %vm623, 1, 0
        %v720 = vsel %vm624, 1, 0
        %v721 = vsel %vm625, 1, 0
        %v722 = vsel %vm626, 1, 0
        %v723 = vsel %vm627, 1, 0
        %v724 = vsel %vm628, 1, 0
        %v725 = vsel %vm629, 1, 0
        %v726 = vsel %vm630, 1, 0
        %v727 = vsel %vm631, 1, 0
        %v728 = vsel %vm632, 1, 0
        %v729 = vsel %vm633, 1, 0
        %v730 = vsel %vm634, 1, 0
        %v731 = vsel %vm635, 1, 0
        %v732 = vsel %vm636, 1, 0
        %v733 = vsel %vm637, 1, 0
        %v734 = vsel %vm638, 1, 0
        %v735 = vsel %vm639, 1, 0
        %v736 = vsel %vm640, 1, 0
        %v737 = vsel %vm641, 1, 0
        %v738 = vsel %vm642, 1, 0
        %v739 = vsel %vm643, 1, 0
        %v740 = vsel %vm644, 1, 0
        %v741 = vsel %vm645, 1, 0
        %v742 = vsel %vm646, 1, 0
        %v743 = vsel %vm647, 1, 0
        %v744 = vsel %vm648, 1, 0
        %v745 = vsel %vm649, 1, 0
        %v746 = vsel %vm650, 1, 0
        %v747 = vsel %vm651, 1, 0
        %v748 = vsel %vm652, 1, 0
        %v749 = vsel %vm653, 1, 0
        %v750 = vsel %vm654, 1, 0
        %v751 = vsel %vm655, 1, 0
        %v752 = vsel %vm656, 1, 0
        %v753 = vsel %vm657, 1, 0
        %v754 = vsel %vm658, 1, 0
        %v755 = vsel %vm659, 1, 0
        %v756 = vsel %vm660, 1, 0
        %v757 = vsel %vm661, 1, 0
        %v758 = vsel %vm662, 1, 0
        %v759 = vsel %vm663, 1, 0
        %v760 = vsel %vm664, 1, 0
        %v761 = vsel %vm665, 1, 0
        %v762 = vsel %vm666, 1, 0
        %v763 = vsel %vm667, 1, 0
        %v764 = vsel %vm668, 1, 0
        %v765 = vsel %vm669, 1, 0
        %v766 = vsel %vm670, 1, 0
        %v767 = vsel %vm671, 1, 0
        %v768 = vsel %vm672, 1, 0
        %v769 = vsel %vm673, 1, 0
        %v770 = vsel %vm674, 1, 0
        %v771 = vsel %vm675, 1, 0
        %v772 = vsel %vm676, 1, 0
        %v773 = vsel %vm677, 1, 0
        %v774 = vsel %vm678, 1, 0
        %v775 = vsel %vm679, 1, 0
        %v776 = vcvt.s32.f32 %v680
        %v777 = vcvt.s32.f32 %v681
        %v778 = vcvt.s32.f32 %v682
        %v779 = vcvt.s32.f32 %v683
        %v780 = vcvt.s32.f32 %v684
        %v781 = vcvt.s32.f32 %v685
        %v782 = vcvt.s32.f32 %v686
        %v783 = vcvt.s32.f32 %v687
        %v784 = vcvt.s32.f32 %v688
        %v785 = vcvt.s32.f32 %v689
        %v786 = vcvt.s32.f32 %v690
        %v787 = vcvt.s32.f32 %v691
        %v788 = vcvt.s32.f32 %v692
        %v789 = vcvt.s32.f32 %v693
        %v790 = vcvt.s32.f32 %v694
        %v791 = vcvt.s32.f32 %v695
        %v792 = vcvt.s32.f32 %v696
        %v793 = vcvt.s32.f32 %v697
        %v794 = vcvt.s32.f32 %v698
        %v795 = vcvt.s32.f32 %v699
        %v796 = vcvt.s32.f32 %v700
        %v797 = vcvt.s32.f32 %v701
        %v798 = vcvt.s32.f32 %v702
        %v799 = vcvt.s32.f32 %v703
        %v800 = vcvt.s32.f32 %v704
        %v801 = vcvt.s32.f32 %v705
        %v802 = vcvt.s32.f32 %v706
        %v803 = vcvt.s32.f32 %v707
        %v804 = vcvt.s32.f32 %v708
        %v805 = vcvt.s32.f32 %v709
        %v806 = vcvt.s32.f32 %v710
        %v807 = vcvt.s32.f32 %v711
        %v808 = vcvt.s32.f32 %v712
        %v809 = vcvt.s32.f32 %v713
        %v810 = vcvt.s32.f32 %v714
        %v811 = vcvt.s32.f32 %v715
        %v812 = vcvt.s32.f32 %v716
        %v813 = vcvt.s32.f32 %v717
        %v814 = vcvt.s32.f32 %v718
        %v815 = vcvt.s32.f32 %v719
        %v816 = vcvt.s32.f32 %v720
        %v817 = vcvt.s32.f32 %v721
        %v818 = vcvt.s32.f32 %v722
        %v819 = vcvt.s32.f32 %v723
        %v820 = vcvt.s32.f32 %v724
        %v821 = vcvt.s32.f32 %v725
        %v822 = vcvt.s32.f32 %v726
        %v823 = vcvt.s32.f32 %v727
        %v824 = vcvt.s32.f32 %v728
        %v825 = vcvt.s32.f32 %v729
        %v826 = vcvt.s32.f32 %v730
        %v827 = vcvt.s32.f32 %v731
        %v828 = vcvt.s32.f32 %v732
        %v829 = vcvt.s32.f32 %v733
        %v830 = vcvt.s32.f32 %v734
        %v831 = vcvt.s32.f32 %v735
        %v832 = vcvt.s32.f32 %v736
        %v833 = vcvt.s32.f32 %v737
        %v834 = vcvt.s32.f32 %v738
        %v835 = vcvt.s32.f32 %v739
        %v836 = vcvt.s32.f32 %v740
        %v837 = vcvt.s32.f32 %v741
        %v838 = vcvt.s32.f32 %v742
        %v839 = vcvt.s32.f32 %v743
        %v840 = vcvt.s32.f32 %v744
        %v841 = vcvt.s32.f32 %v745
        %v842 = vcvt.s32.f32 %v746
        %v843 = vcvt.s32.f32 %v747
        %v844 = vcvt.s32.f32 %v748
        %v845 = vcvt.s32.f32 %v749
        %v846 = vcvt.s32.f32 %v750
        %v847 = vcvt.s32.f32 %v751
        %v848 = vcvt.s32.f32 %v752
        %v849 = vcvt.s32.f32 %v753
        %v850 = vcvt.s32.f32 %v754
        %v851 = vcvt.s32.f32 %v755
        %v852 = vcvt.s32.f32 %v756
        %v853 = vcvt.s32.f32 %v757
        %v854 = vcvt.s32.f32 %v758
        %v855 = vcvt.s32.f32 %v759
        %v856 = vcvt.s32.f32 %v760
        %v857 = vcvt.s32.f32 %v761
        %v858 = vcvt.s32.f32 %v762
        %v859 = vcvt.s32.f32 %v763
        %v860 = vcvt.s32.f32 %v764
        %v861 = vcvt.s32.f32 %v765
        %v862 = vcvt.s32.f32 %v766
        %v863 = vcvt.s32.f32 %v767
        %v864 = vcvt.s32.f32 %v768
        %v865 = vcvt.s32.f32 %v769
        %v866 = vcvt.s32.f32 %v770
        %v867 = vcvt.s32.f32 %v771
        %v868 = vcvt.s32.f32 %v772
        %v869 = vcvt.s32.f32 %v773
        %v870 = vcvt.s32.f32 %v774
        %v871 = vcvt.s32.f32 %v775
        %872 = vmatpush.msra.mxu0 %v791
        %873 = vmatpush.msra.mxu0 %v790
        %874 = vmatpush.msra.mxu0 %v789
        %875 = vmatpush.msra.mxu0 %v788
        %876 = vmatpush.msra.mxu0 %v787
        %877 = vmatpush.msra.mxu0 %v786
        %878 = vmatpush.msra.mxu0 %v785
        %879 = vmatpush.msra.mxu0 %v784
        %880 = vmatpush.msra.mxu0 %v783
        %881 = vmatpush.msra.mxu0 %v782
        %882 = vmatpush.msra.mxu0 %v781
        %883 = vmatpush.msra.mxu0 %v780
        %884 = vmatpush.msra.mxu0 %v779
        %885 = vmatpush.msra.mxu0 %v778
        %886 = vmatpush.msra.mxu0 %v777
        %887 = vmatpush.msra.mxu0 %v776
        %888 = vmatmul.f32.gmra.mxu0 %v285
        %v889 = vpop.f32.mrf.mxu0
        %v890 = vadd.f32 0.0, %v889
        %891 = vdwg.mxu0
        %892 = vmatpush.msra.mxu0 %v807
        %893 = vmatpush.msra.mxu0 %v806
        %894 = vmatpush.msra.mxu0 %v805
        %895 = vmatpush.msra.mxu0 %v804
        %896 = vmatpush.msra.mxu0 %v803
        %897 = vmatpush.msra.mxu0 %v802
        %898 = vmatpush.msra.mxu0 %v801
        %899 = vmatpush.msra.mxu0 %v800
        %900 = vmatpush.msra.mxu0 %v799
        %901 = vmatpush.msra.mxu0 %v798
        %902 = vmatpush.msra.mxu0 %v797
        %903 = vmatpush.msra.mxu0 %v796
        %904 = vmatpush.msra.mxu0 %v795
        %905 = vmatpush.msra.mxu0 %v794
        %906 = vmatpush.msra.mxu0 %v793
        %907 = vmatpush.msra.mxu0 %v792
        %908 = vmatmul.f32.gmra.mxu0 %v286
        %v909 = vpop.f32.mrf.mxu0
        %v910 = vadd.f32 %v890, %v909
        %911 = vdwg.mxu0
        %912 = vmatpush.msra.mxu0 %v823
        %913 = vmatpush.msra.mxu0 %v822
        %914 = vmatpush.msra.mxu0 %v821
        %915 = vmatpush.msra.mxu0 %v820
        %916 = vmatpush.msra.mxu0 %v819
        %917 = vmatpush.msra.mxu0 %v818
        %918 = vmatpush.msra.mxu0 %v817
        %919 = vmatpush.msra.mxu0 %v816
        %920 = vmatpush.msra.mxu0 %v815
        %921 = vmatpush.msra.mxu0 %v814
        %922 = vmatpush.msra.mxu0 %v813
        %923 = vmatpush.msra.mxu0 %v812
        %924 = vmatpush.msra.mxu0 %v811
        %925 = vmatpush.msra.mxu0 %v810
        %926 = vmatpush.msra.mxu0 %v809
        %927 = vmatpush.msra.mxu0 %v808
        %928 = vmatmul.f32.gmra.mxu0 %v287
        %v929 = vpop.f32.mrf.mxu0
        %v930 = vadd.f32 %v910, %v929
        %931 = vdwg.mxu0
        %932 = vmatpush.msra.mxu0 %v839
        %933 = vmatpush.msra.mxu0 %v838
        %934 = vmatpush.msra.mxu0 %v837
        %935 = vmatpush.msra.mxu0 %v836
        %936 = vmatpush.msra.mxu0 %v835
        %937 = vmatpush.msra.mxu0 %v834
        %938 = vmatpush.msra.mxu0 %v833
        %939 = vmatpush.msra.mxu0 %v832
        %940 = vmatpush.msra.mxu0 %v831
        %941 = vmatpush.msra.mxu0 %v830
        %942 = vmatpush.msra.mxu0 %v829
        %943 = vmatpush.msra.mxu0 %v828
        %944 = vmatpush.msra.mxu0 %v827
        %945 = vmatpush.msra.mxu0 %v826
        %946 = vmatpush.msra.mxu0 %v825
        %947 = vmatpush.msra.mxu0 %v824
        %948 = vmatmul.f32.gmra.mxu0 %v288
        %v949 = vpop.f32.mrf.mxu0
        %v950 = vadd.f32 %v930, %v949
        %951 = vdwg.mxu0
        %952 = vmatpush.msra.mxu0 %v855
        %953 = vmatpush.msra.mxu0 %v854
        %954 = vmatpush.msra.mxu0 %v853
        %955 = vmatpush.msra.mxu0 %v852
        %956 = vmatpush.msra.mxu0 %v851
        %957 = vmatpush.msra.mxu0 %v850
        %958 = vmatpush.msra.mxu0 %v849
        %959 = vmatpush.msra.mxu0 %v848
        %960 = vmatpush.msra.mxu0 %v847
        %961 = vmatpush.msra.mxu0 %v846
        %962 = vmatpush.msra.mxu0 %v845
        %963 = vmatpush.msra.mxu0 %v844
        %964 = vmatpush.msra.mxu0 %v843
        %965 = vmatpush.msra.mxu0 %v842
        %966 = vmatpush.msra.mxu0 %v841
        %967 = vmatpush.msra.mxu0 %v840
        %968 = vmatmul.f32.gmra.mxu0 %v289
        %v969 = vpop.f32.mrf.mxu0
        %v970 = vadd.f32 %v950, %v969
        %971 = vdwg.mxu0
        %972 = vmatpush.msra.mxu0 %v871
        %973 = vmatpush.msra.mxu0 %v870
        %974 = vmatpush.msra.mxu0 %v869
        %975 = vmatpush.msra.mxu0 %v868
        %976 = vmatpush.msra.mxu0 %v867
        %977 = vmatpush.msra.mxu0 %v866
        %978 = vmatpush.msra.mxu0 %v865
        %979 = vmatpush.msra.mxu0 %v864
        %980 = vmatpush.msra.mxu0 %v863
        %981 = vmatpush.msra.mxu0 %v862
        %982 = vmatpush.msra.mxu0 %v861
        %983 = vmatpush.msra.mxu0 %v860
        %984 = vmatpush.msra.mxu0 %v859
        %985 = vmatpush.msra.mxu0 %v858
        %986 = vmatpush.msra.mxu0 %v857
        %987 = vmatpush.msra.mxu0 %v856
        %988 = vmatmul.f32.gmra.mxu0 %v290
        %v989 = vpop.f32.mrf.mxu0
        %v990 = vadd.f32 %v970, %v989
        %991 = vdwg.mxu0
        %v992 = vld [vmem:[%s233] sm:$0x1]
        %v993 = vld [vmem:[%s233 + $0x1] sm:$0x1]
        %v994 = vld [vmem:[%s233 + $0x2] sm:$0x1]
        %v995 = vld [vmem:[%s233 + $0x3] sm:$0x1]
        %v996 = vld [vmem:[%s233 + $0x4] sm:$0x1]
        %v997 = vld [vmem:[%s233 + $0x5] sm:$0x1]
        %v998 = vld [vmem:[%s233 + $0x6] sm:$0x1]
        %v999 = vld [vmem:[%s233 + $0x7] sm:$0x1]
        %vm1000 = vcmp.gt.f32.partialorder %v992, 0.0
        %vm1001 = vcmp.gt.f32.partialorder %v993, 0.0
        %vm1002 = vcmp.gt.f32.partialorder %v994, 0.0
        %vm1003 = vcmp.gt.f32.partialorder %v995, 0.0
        %vm1004 = vcmp.gt.f32.partialorder %v996, 0.0
        %vm1005 = vcmp.gt.f32.partialorder %v997, 0.0
        %vm1006 = vcmp.gt.f32.partialorder %v998, 0.0
        %vm1007 = vcmp.gt.f32.partialorder %v999, 0.0
        %v1009 = vrot.slane %v990, 1
        %v1010 = vrot.slane %v990, 2
        %v1011 = vrot.slane %v990, 3
        %v1012 = vrot.slane %v990, 4
        %v1013 = vrot.slane %v990, 5
        %v1014 = vrot.slane %v990, 6
        %v1015 = vrot.slane %v990, 7
        %v1023 = vsel %vm1000, %v990, 0.0
        %v1024 = vsel %vm1001, %v1009, 0.0
        %v1025 = vsel %vm1002, %v1010, 0.0
        %v1026 = vsel %vm1003, %v1011, 0.0
        %v1027 = vsel %vm1004, %v1012, 0.0
        %v1028 = vsel %vm1005, %v1013, 0.0
        %v1029 = vsel %vm1006, %v1014, 0.0
        %v1030 = vsel %vm1007, %v1015, 0.0
        %v1031 = vmul.f32 %v1023, %v992
        %v1032 = vmul.f32 %v1024, %v993
        %v1033 = vmul.f32 %v1025, %v994
        %v1034 = vmul.f32 %v1026, %v995
        %v1035 = vmul.f32 %v1027, %v996
        %v1036 = vmul.f32 %v1028, %v997
        %v1037 = vmul.f32 %v1029, %v998
        %v1038 = vmul.f32 %v1030, %v999
        %1047 = vst [vmem:[#allocation1] ss:$9 sm:$0xff] %v1031
        %s1048 = scalar_lea.vmem [#allocation1], 1
        %1049 = vst [vmem:[%s1048] ss:$9 sm:$0xff] %v1032
        %s1050 = scalar_lea.vmem [#allocation1], 2
        %1051 = vst [vmem:[%s1050] ss:$9 sm:$0xff] %v1033
        %s1052 = scalar_lea.vmem [#allocation1], 3
        %1053 = vst [vmem:[%s1052] ss:$9 sm:$0xff] %v1034
        %s1054 = scalar_lea.vmem [#allocation1], 4
        %1055 = vst [vmem:[%s1054] ss:$9 sm:$0xff] %v1035
        %s1056 = scalar_lea.vmem [#allocation1], 5
        %1057 = vst [vmem:[%s1056] ss:$9 sm:$0xff] %v1036
        %s1058 = scalar_lea.vmem [#allocation1], 6
        %1059 = vst [vmem:[%s1058] ss:$9 sm:$0xff] %v1037
        %s1060 = scalar_lea.vmem [#allocation1], 7
        %1061 = vst [vmem:[%s1060] ss:$9 sm:$0xff] %v1038
        %v1062 = vld [vmem:[#allocation1] sm:$0xff]
        %vm1064 = vcmask 130048
        %v1065 = vsel %vm1064, %v1062, 0.0
        %1066 = vadd.xlane.f32.xlu0 %v1065
        %v1067 = vpop.xlane.xlu0 %1066
        %v1068 = vrot.slane %v1067, 4
        %v1069 = vadd.f32 %v1067, %v1068
        %v1070 = vrot.slane %v1069, 2
        %v1071 = vadd.f32 %v1069, %v1070
        %v1072 = vrot.slane %v1071, 1
        %v1073 = vadd.f32 %v1071, %v1072
        %s1074 = vtos %v1073
        %v1075 = vstv %s1074
        %vm1076 = vcmask 0
        %1077 = vst.msk [vmem:[%s265] sm:$0x1] %vm1076, %v1075
        %1086 = vst [vmem:[#allocation1] ss:$9 sm:$0xff] %v992
        %s1087 = scalar_lea.vmem [#allocation1], 1
        %1088 = vst [vmem:[%s1087] ss:$9 sm:$0xff] %v993
        %s1089 = scalar_lea.vmem [#allocation1], 2
        %1090 = vst [vmem:[%s1089] ss:$9 sm:$0xff] %v994
        %s1091 = scalar_lea.vmem [#allocation1], 3
        %1092 = vst [vmem:[%s1091] ss:$9 sm:$0xff] %v995
        %s1093 = scalar_lea.vmem [#allocation1], 4
        %1094 = vst [vmem:[%s1093] ss:$9 sm:$0xff] %v996
        %s1095 = scalar_lea.vmem [#allocation1], 5
        %1096 = vst [vmem:[%s1095] ss:$9 sm:$0xff] %v997
        %s1097 = scalar_lea.vmem [#allocation1], 6
        %1098 = vst [vmem:[%s1097] ss:$9 sm:$0xff] %v998
        %s1099 = scalar_lea.vmem [#allocation1], 7
        %1100 = vst [vmem:[%s1099] ss:$9 sm:$0xff] %v999
        %v1101 = vld [vmem:[#allocation1] sm:$0xff]
        %v1103 = vsel %vm1064, %v1101, 0.0
        %1104 = vadd.xlane.f32.xlu0 %v1103
        %v1105 = vpop.xlane.xlu0 %1104
        %v1106 = vrot.slane %v1105, 4
        %v1107 = vadd.f32 %v1105, %v1106
        %v1108 = vrot.slane %v1107, 2
        %v1109 = vadd.f32 %v1107, %v1108
        %v1110 = vrot.slane %v1109, 1
        %v1111 = vadd.f32 %v1109, %v1110
        %s1112 = vtos %v1111
        %v1113 = vstv %s1112
        %vm1114 = vcmask 8200
        %1115 = vst.msk [vmem:[%s265] sm:$0x1] %vm1114, %v1113
        %s1116 = sand.u32 %s109, 1
        %s1117 = scalar_lea.sflag [#allocation4], %s1116
        %s1118 = sand.u32 %s109, 1
        %s1119 = scalar_lea.vmem [#allocation8], %s1118
        // Predicated region
        $region45: #{tpu_custom_call.1} parent=31 // pred_check
          %p1120 = pneg %p119
        $region46: #{tpu_custom_call.1} parent=31 // pred_check_branch
          %1122 = sbr.rel (%p1120) target = $region48
        $region47: #{tpu_custom_call.1} parent=31 // pred_region
          %1124 = vsyncadd %s1117, 0
          %s1125 = scalar_lea.hbm %s3, %s23
          %s1127 = sshll.u32 %s1119, 4
          %s1128 = int_to_ptr.vmem [resolvable:$true] %s1127
          %s1129 = sshll.u32 %s1125, 4
          %s1130 = int_to_ptr.hbm [resolvable:$true] %s1129
          %1132 = dma.vmem_to_hbm [thread:$0]  %s1128, 16, %s1130, %s1117
        $region48: #{tpu_custom_call.1} parent=31 // pred_fallthru
          _
      $region32: #{tpu_custom_call.1} parent=5 // pred_fallthru
        _
      %p1133 = scmp.le.s32.totalorder 2, %s18
      // Predicated region
      $region49: #{tpu_custom_call.1} parent=5 // pred_check
        %p1134 = pneg %p1133
      $region50: #{tpu_custom_call.1} parent=5 // pred_check_branch
        %1136 = sbr.rel (%p1134) target = $region52
      $region51: #{tpu_custom_call.1} parent=5 // pred_region
        %s1137 = ssub.s32 %s18, 2
        // Predicated region
        $region53: #{tpu_custom_call.1} parent=51 // pred_check
          %p1138 = pneg %p125
        $region54: #{tpu_custom_call.1} parent=51 // pred_check_branch
          %1140 = sbr.rel (%p1138) target = $region56
        $region55: #{tpu_custom_call.1} parent=51 // pred_region
          %s1141 = sand.u32 %s110, 1
          %s1142 = scalar_lea.sflag [#allocation4], %s1141
          %s1143 = sand.u32 %s110, 1
          %s1144 = scalar_lea.vmem [#allocation8], %s1143
          %1146 = dma.done %s1142, 16
        $region56: #{tpu_custom_call.1} parent=51 // pred_fallthru
          _
      $region52: #{tpu_custom_call.1} parent=5 // pred_fallthru
        _
    $region6: #{tpu_custom_call.1} parent=1 // loop_footer
      %s22 = sadd.s32 1, %s18
    $region7: #{tpu_custom_call.1} parent=1 // loop_footer_branch
      %17 = sbr.rel target = $region3
    $region8: #{tpu_custom_call.1} parent=1 // loop_exit
      _
    %1147 = vsyncpa [#allocation3], 1
    %s1148 = scalar_lea.sflag [#allocation3], 1
    %1149 = vsyncpa %s1148, 1
    %1150 = vsyncpa [#allocation6], 1
    %s1151 = scalar_lea.sflag [#allocation6], 1
    %1152 = vsyncpa %s1151, 1
    %1153 = vsyncpa [#allocation4], 1
    %s1154 = scalar_lea.sflag [#allocation4], 1
    %1155 = vsyncpa %s1154, 1

</llo_original>
